<compile_context>
chip_gen: v7x
topology: tpu7x:2x2x1
jax: 0.10.0
libtpu: 0.0.40
codegen_flags: <defaults>
</compile_context>

<pallas_src>
import math

import jax
import jax.numpy as jnp
from jax.experimental import pallas as pl
from jax.experimental.pallas import tpu as pltpu

_MiB = 1024 * 1024


def _compute_pads(h, w, kernel_size, stride):
    # Exactly mirrors CustomPadding.forward (symmetric pad on both sides).
    pad_h = max((math.ceil(h / stride) * stride - h + kernel_size - 1) // 2, 0)
    pad_w = max((math.ceil(w / stride) * stride - w + kernel_size - 1) // 2, 0)
    return pad_h, pad_w


def _tpu_vmem_capacity_bytes():
    """Physical per-core VMEM, with a conservative (v7x) fallback."""
    try:
        info = pltpu.get_tpu_info()
        cap = int(getattr(info, "vmem_capacity_bytes", 0) or 0)
        if cap > 0:
            return cap
    except Exception:
        pass
    return 64 * _MiB  # v7x per-TC VMEM; safe lower bound for all generations.


def _pick_block_planes(nc, in_plane_bytes, out_plane_bytes, tile_budget,
                       multi_tc):
    """How many (H, W) planes to process per grid step.

    Double-buffered input + output tiles must fit in `tile_budget`.  On
    multi-TensorCore chips (v7x) we additionally prefer >= 4 grid steps and an
    even step count so the 'parallel' axis splits evenly across both cores,
    but never shrink the input tile below ~512 KiB to get there.  On
    single-TC chips (v5e/v6e) we just take the largest tile that fits.
    """
    bytes_per_plane = 2 * (in_plane_bytes + out_plane_bytes)  # 2x: dbl-buffer
    tb = max(1, tile_budget // bytes_per_plane)
    tb = min(tb, nc)

    if multi_tc:
        min_tb_for_dma = max(1, pl.cdiv(512 * 1024, in_plane_bytes))
        steps = pl.cdiv(nc, tb)
        if steps < 4:
            tb_alt = pl.cdiv(nc, 4)
            if tb_alt >= min_tb_for_dma:
                tb = tb_alt
                steps = pl.cdiv(nc, tb)
        if steps > 1 and steps % 2 == 1:
            tb_alt = pl.cdiv(nc, steps + 1)
            if tb_alt >= min_tb_for_dma:
                tb = tb_alt
    return tb


def _make_pad_kernel(tb, h, w, pad_h, pad_w):
    h_out = h + 2 * pad_h
    w_out = w + 2 * pad_w

    def pad_kernel(x_ref, o_ref):
        dt = o_ref.dtype
        # Every output element is written exactly once: thin zero strips
        # around the border plus one interior store of the input tile.
        if pad_h > 0:
            zrow = jnp.zeros((tb, pad_h, w_out), dt)
            o_ref[:, pl.ds(0, pad_h), :] = zrow                    # top rows
            o_ref[:, pl.ds(pad_h + h, pad_h), :] = zrow            # bottom rows
        if pad_w > 0:
            zcol = jnp.zeros((tb, h, pad_w), dt)
            o_ref[:, pl.ds(pad_h, h), pl.ds(0, pad_w)] = zcol          # left
            o_ref[:, pl.ds(pad_h, h), pl.ds(pad_w + w, pad_w)] = zcol  # right
        # Interior: single store, no concat temporaries.
        o_ref[:, pl.ds(pad_h, h), pl.ds(pad_w, w)] = x_ref[...]

    return pad_kernel


def custom_padding(x, kernel_size, stride, _force_tb=None):
    """Pallas implementation of CustomPadding.forward.

    x: (N, C, H, W).  Returns (N, C, H + 2*pad_h, W + 2*pad_w) with the input
    centered and zeros around it, matching F.pad(x, (pw, pw, ph, ph)).
    """
    n, c, h, w = x.shape
    pad_h, pad_w = _compute_pads(h, w, kernel_size, stride)
    if pad_h == 0 and pad_w == 0:
        return x  # nothing to pad; skip the HBM round trip entirely.

    h_out = h + 2 * pad_h
    w_out = w + 2 * pad_w
    nc = n * c
    itemsize = jnp.dtype(x.dtype).itemsize

    # Free view: NCHW is contiguous, so this is metadata only.
    x_flat = x.reshape(nc, h, w)

    cap = _tpu_vmem_capacity_bytes()
    vmem_limit = min((cap * 3) // 4, 96 * _MiB)   # 48 MiB v7x / 96 MiB v5e,v6e
    tile_budget = vmem_limit // 2
    multi_tc = cap < 96 * _MiB                    # v7x heuristic (64 MiB/TC)

    if _force_tb is not None:
        tb = int(_force_tb)
    else:
        tb = _pick_block_planes(nc, h * w * itemsize, h_out * w_out * itemsize,
                                tile_budget, multi_tc)
    grid = (pl.cdiv(nc, tb),)

    cost = pl.CostEstimate(
        flops=0,
        transcendentals=0,
        bytes_accessed=nc * (h * w + h_out * w_out) * itemsize,
    )

    out_flat = pl.pallas_call(
        _make_pad_kernel(tb, h, w, pad_h, pad_w),
        out_shape=jax.ShapeDtypeStruct((nc, h_out, w_out), x.dtype),
        grid_spec=pl.GridSpec(
            grid=grid,
            # Full (H, W) extents per block -> contiguous DMA, (8,128) rule
            # satisfied by "equal the full array dims".
            in_specs=[pl.BlockSpec((tb, h, w), lambda i: (i, 0, 0))],
            out_specs=pl.BlockSpec((tb, h_out, w_out), lambda i: (i, 0, 0)),
        ),
        compiler_params=pltpu.CompilerParams(
            dimension_semantics=("parallel",),
            vmem_limit_bytes=vmem_limit,
        ),
        cost_estimate=cost,
    )(x_flat)

    return out_flat.reshape(n, c, h_out, w_out)


def _check(x, kernel_size, stride, _force_tb=None):
    out = jax.block_until_ready(
        custom_padding(x, kernel_size, stride, _force_tb=_force_tb))
    ph, pw = _compute_pads(x.shape[2], x.shape[3], kernel_size, stride)
    ref = jnp.pad(x, ((0, 0), (0, 0), (ph, ph), (pw, pw)))
    assert out.shape == ref.shape, (out.shape, ref.shape)
    assert jnp.allclose(out, ref), "mismatch vs reference padding"


if __name__ == "__main__":
    # VAECNN defaults: kernel_size=4, stride=2.
    kernel_size = 4
    stride = 2
    key = jax.random.PRNGKey(0)

    # Small shape consistent with the module's forward (N, C, H, W).
    x_small = jax.random.normal(key, (2, 4, 16, 16), dtype=jnp.float32)
    _check(x_small, kernel_size, stride)

    # Partial last block (nc=8, tb=3 -> nc % tb != 0) to exercise the masked
    # writeback of the final grid step.
    _check(x_small, kernel_size, stride, _force_tb=3)

    # A more VAE-like shape that exercises a multi-step "parallel" grid on
    # multi-core parts (nc = 512 planes).
    x_big = jax.random.normal(key, (4, 128, 32, 32), dtype=jnp.float32)
    _check(x_big, kernel_size, stride)

    print("KERNEL_OK")
</pallas_src>

<mosaic_0001>
module attributes {stable_mosaic.version = 11 : i64} {
  func.func @pad_kernel(%arg0: i32, %arg1: memref<8x16x16xf32, #tpu.memory_space<vmem>>, %arg2: memref<8x18x18xf32, #tpu.memory_space<vmem>>) attributes {dimension_semantics = [#tpu.dimension_semantics<parallel>], iteration_bounds = array<i64: 1>, scalar_prefetch = 0 : i64, scratch_operands = 0 : i64, tpu.core_type = #tpu.core_type<tc>, window_params = [{transform_indices = @transform_0, window_bounds = array<i64: 8, 16, 16>}, {transform_indices = @transform_1, window_bounds = array<i64: 8, 18, 18>}]} {
    %cst = arith.constant 0.000000e+00 : f32
    %0 = vector.broadcast %cst : f32 to vector<8x1x18xf32>
    %c0 = arith.constant 0 : index
    %c0_0 = arith.constant 0 : index
    %c0_1 = arith.constant 0 : index
    %1 = vector.load %arg2[%c0, %c0_0, %c0_1] : memref<8x18x18xf32, #tpu.memory_space<vmem>>, vector<8x1x18xf32>
    tpu.vector_store %arg2[%c0, %c0_0, %c0_1], %0 {strides = array<i32>} : memref<8x18x18xf32, #tpu.memory_space<vmem>>, vector<8x1x18xf32>,
    %c0_2 = arith.constant 0 : index
    %c17 = arith.constant 17 : index
    %c0_3 = arith.constant 0 : index
    %2 = vector.load %arg2[%c0_2, %c17, %c0_3] : memref<8x18x18xf32, #tpu.memory_space<vmem>>, vector<8x1x18xf32>
    tpu.vector_store %arg2[%c0_2, %c17, %c0_3], %0 {strides = array<i32>} : memref<8x18x18xf32, #tpu.memory_space<vmem>>, vector<8x1x18xf32>,
    %cst_4 = arith.constant 0.000000e+00 : f32
    %3 = vector.broadcast %cst_4 : f32 to vector<8x16x1xf32>
    %c0_5 = arith.constant 0 : index
    %c1 = arith.constant 1 : index
    %c0_6 = arith.constant 0 : index
    %4 = vector.load %arg2[%c0_5, %c1, %c0_6] : memref<8x18x18xf32, #tpu.memory_space<vmem>>, vector<8x16x1xf32>
    tpu.vector_store %arg2[%c0_5, %c1, %c0_6], %3 {strides = array<i32>} : memref<8x18x18xf32, #tpu.memory_space<vmem>>, vector<8x16x1xf32>,
    %c0_7 = arith.constant 0 : index
    %c1_8 = arith.constant 1 : index
    %c17_9 = arith.constant 17 : index
    %5 = vector.load %arg2[%c0_7, %c1_8, %c17_9] : memref<8x18x18xf32, #tpu.memory_space<vmem>>, vector<8x16x1xf32>
    tpu.vector_store %arg2[%c0_7, %c1_8, %c17_9], %3 {strides = array<i32>} : memref<8x18x18xf32, #tpu.memory_space<vmem>>, vector<8x16x1xf32>,
    %c0_10 = arith.constant 0 : index
    %c0_11 = arith.constant 0 : index
    %c0_12 = arith.constant 0 : index
    %6 = vector.load %arg1[%c0_10, %c0_11, %c0_12] : memref<8x16x16xf32, #tpu.memory_space<vmem>>, vector<8x16x16xf32>
    %c0_13 = arith.constant 0 : index
    %c1_14 = arith.constant 1 : index
    %c1_15 = arith.constant 1 : index
    %7 = vector.load %arg2[%c0_13, %c1_14, %c1_15] : memref<8x18x18xf32, #tpu.memory_space<vmem>>, vector<8x16x16xf32>
    tpu.vector_store %arg2[%c0_13, %c1_14, %c1_15], %6 {strides = array<i32>} : memref<8x18x18xf32, #tpu.memory_space<vmem>>, vector<8x16x16xf32>,
    return
  }
  func.func @transform_0(%arg0: i32) -> (i32, i32, i32) {
    %c0_i32 = arith.constant 0 : i32
    %c0_i32_0 = arith.constant 0 : i32
    %c0_i32_1 = arith.constant 0 : i32
    return %arg0, %c0_i32, %c0_i32_0 : i32, i32, i32
  }
  func.func @transform_1(%arg0: i32) -> (i32, i32, i32) {
    %c0_i32 = arith.constant 0 : i32
    %c0_i32_0 = arith.constant 0 : i32
    %c0_i32_1 = arith.constant 0 : i32
    return %arg0, %c0_i32, %c0_i32_0 : i32, i32, i32
  }
}

</mosaic_0001>

<llo_original>
// kernel: tpu_custom_call.1
$region0: #{tpu_custom_call.1}
  #allocation0 [shape = 'u32[]', space=smem, size = 0x4, offset = 0x4, fixed_abs, tag = 'smem constant byte address 0x4 - core index']
  #allocation1 [shape = 'u32[144,128]{1,0:T(1,128)}', space=vmem, size = 0x12000, scoped, tag = 'internal scratch']
  %s0 = inlined_call_operand.hbm [shape: f32[8,16,16], index: 0, kind: input, shape index: {}]
  %s1 = inlined_call_operand.vmem [shape: f32[8,18,18], index: 1, kind: output, shape index: {}]
  %s2 = sld [smem:[#allocation0]]
  $region18: #{tpu_custom_call.1} parent=0
    _
  %s4 = ssub.s32 1, %s2
  %s5 = scalar_select 0, %s4, %s2
  $region1: #{tpu_custom_call.1} parent=0
    #allocation2 [shape = 'u8[65536]{0}', space=vmem, size = 0x10000, scoped, tag = 'input window, operand 0, single buffered']
    #allocation3 [shape = 's32[1]{0}', space=sflag, size = 0x4, scoped, tag = 'scoped memory for tpu_custom_call.1']
    %6 = vsyncpa [#allocation3], 0
    // Predicated region
    $region2: #{tpu_custom_call.1} parent=1 // pred_check
      _
    $region3: #{tpu_custom_call.1} parent=1 // pred_check_branch
      %8 = sbr.rel (0) target = $region5
    $region4: #{tpu_custom_call.1} parent=1 // pred_region
      %s10 = ssub.s32 2048, 2048
      %11 = vsyncadd [#allocation3], %s10
      %s12 = sshll.u32 [#allocation2], 4
      %s13 = int_to_ptr.vmem [resolvable:$true] %s12
      %18 = dma.hbm_to_vmem [thread:$0]  %s0, 2048, %s13, [#allocation3], 128, 128, 8
    $region5: #{tpu_custom_call.1} parent=1 // pred_fallthru
      _
    // Predicated region
    $region6: #{tpu_custom_call.1} parent=1 // pred_check
      _
    $region7: #{tpu_custom_call.1} parent=1 // pred_check_branch
      %20 = sbr.rel (0) target = $region9
    $region8: #{tpu_custom_call.1} parent=1 // pred_region
      %21 = dma.done [#allocation3], 2048
    $region9: #{tpu_custom_call.1} parent=1 // pred_fallthru
      _
    %vm22 = vcmask 139264
    %23 = vst.msk [vmem:[%s1] sm:$0x1] %vm22, 0.0
    %24 = vst.msk [vmem:[%s1 + $0x18] sm:$0x1] %vm22, 0.0
    %25 = vst.msk [vmem:[%s1 + $0x30] sm:$0x1] %vm22, 0.0
    %26 = vst.msk [vmem:[%s1 + $0x48] sm:$0x1] %vm22, 0.0
    %27 = vst.msk [vmem:[%s1 + $0x60] sm:$0x1] %vm22, 0.0
    %28 = vst.msk [vmem:[%s1 + $0x78] sm:$0x1] %vm22, 0.0
    %29 = vst.msk [vmem:[%s1 + $0x90] sm:$0x1] %vm22, 0.0
    %30 = vst.msk [vmem:[%s1 + $0xa8] sm:$0x1] %vm22, 0.0
    %31 = vst.msk [vmem:[%s1 + $0x11] sm:$0x1] %vm22, 0.0
    %32 = vst.msk [vmem:[%s1 + $0x29] sm:$0x1] %vm22, 0.0
    %33 = vst.msk [vmem:[%s1 + $0x41] sm:$0x1] %vm22, 0.0
    %34 = vst.msk [vmem:[%s1 + $0x59] sm:$0x1] %vm22, 0.0
    %35 = vst.msk [vmem:[%s1 + $0x71] sm:$0x1] %vm22, 0.0
    %36 = vst.msk [vmem:[%s1 + $0x89] sm:$0x1] %vm22, 0.0
    %37 = vst.msk [vmem:[%s1 + $0xa1] sm:$0x1] %vm22, 0.0
    %38 = vst.msk [vmem:[%s1 + $0xb9] sm:$0x1] %vm22, 0.0
    %vm39 = vcmask 7168
    %40 = vst.msk [vmem:[%s1 + $0x1] sm:$0xff] %vm39, 0.0
    %41 = vst.msk [vmem:[%s1 + $0x9] sm:$0xff] %vm39, 0.0
    %42 = vst.msk [vmem:[%s1 + $0x19] sm:$0xff] %vm39, 0.0
    %43 = vst.msk [vmem:[%s1 + $0x21] sm:$0xff] %vm39, 0.0
    %44 = vst.msk [vmem:[%s1 + $0x31] sm:$0xff] %vm39, 0.0
    %45 = vst.msk [vmem:[%s1 + $0x39] sm:$0xff] %vm39, 0.0
    %46 = vst.msk [vmem:[%s1 + $0x49] sm:$0xff] %vm39, 0.0
    %47 = vst.msk [vmem:[%s1 + $0x51] sm:$0xff] %vm39, 0.0
    %48 = vst.msk [vmem:[%s1 + $0x61] sm:$0xff] %vm39, 0.0
    %49 = vst.msk [vmem:[%s1 + $0x69] sm:$0xff] %vm39, 0.0
    %50 = vst.msk [vmem:[%s1 + $0x79] sm:$0xff] %vm39, 0.0
    %51 = vst.msk [vmem:[%s1 + $0x81] sm:$0xff] %vm39, 0.0
    %52 = vst.msk [vmem:[%s1 + $0x91] sm:$0xff] %vm39, 0.0
    %53 = vst.msk [vmem:[%s1 + $0x99] sm:$0xff] %vm39, 0.0
    %54 = vst.msk [vmem:[%s1 + $0xa9] sm:$0xff] %vm39, 0.0
    %55 = vst.msk [vmem:[%s1 + $0xb1] sm:$0xff] %vm39, 0.0
    %vm56 = vcmask 146568
    %57 = vst.msk [vmem:[%s1 + $0x1] sm:$0xff] %vm56, 0.0
    %58 = vst.msk [vmem:[%s1 + $0x9] sm:$0xff] %vm56, 0.0
    %59 = vst.msk [vmem:[%s1 + $0x19] sm:$0xff] %vm56, 0.0
    %60 = vst.msk [vmem:[%s1 + $0x21] sm:$0xff] %vm56, 0.0
    %61 = vst.msk [vmem:[%s1 + $0x31] sm:$0xff] %vm56, 0.0
    %62 = vst.msk [vmem:[%s1 + $0x39] sm:$0xff] %vm56, 0.0
    %63 = vst.msk [vmem:[%s1 + $0x49] sm:$0xff] %vm56, 0.0
    %64 = vst.msk [vmem:[%s1 + $0x51] sm:$0xff] %vm56, 0.0
    %65 = vst.msk [vmem:[%s1 + $0x61] sm:$0xff] %vm56, 0.0
    %66 = vst.msk [vmem:[%s1 + $0x69] sm:$0xff] %vm56, 0.0
    %67 = vst.msk [vmem:[%s1 + $0x79] sm:$0xff] %vm56, 0.0
    %68 = vst.msk [vmem:[%s1 + $0x81] sm:$0xff] %vm56, 0.0
    %69 = vst.msk [vmem:[%s1 + $0x91] sm:$0xff] %vm56, 0.0
    %70 = vst.msk [vmem:[%s1 + $0x99] sm:$0xff] %vm56, 0.0
    %71 = vst.msk [vmem:[%s1 + $0xa9] sm:$0xff] %vm56, 0.0
    %72 = vst.msk [vmem:[%s1 + $0xb1] sm:$0xff] %vm56, 0.0
    %v73 = vld [vmem:[#allocation2] sm:$0xff]
    %v74 = vld [vmem:[#allocation2 + $0x8] sm:$0xff]
    %v75 = vld [vmem:[#allocation2 + $0x10] sm:$0xff]
    %v76 = vld [vmem:[#allocation2 + $0x18] sm:$0xff]
    %v77 = vld [vmem:[#allocation2 + $0x20] sm:$0xff]
    %v78 = vld [vmem:[#allocation2 + $0x28] sm:$0xff]
    %v79 = vld [vmem:[#allocation2 + $0x30] sm:$0xff]
    %v80 = vld [vmem:[#allocation2 + $0x38] sm:$0xff]
    %v81 = vld [vmem:[#allocation2 + $0x40] sm:$0xff]
    %v82 = vld [vmem:[#allocation2 + $0x48] sm:$0xff]
    %v83 = vld [vmem:[#allocation2 + $0x50] sm:$0xff]
    %v84 = vld [vmem:[#allocation2 + $0x58] sm:$0xff]
    %v85 = vld [vmem:[#allocation2 + $0x60] sm:$0xff]
    %v86 = vld [vmem:[#allocation2 + $0x68] sm:$0xff]
    %v87 = vld [vmem:[#allocation2 + $0x70] sm:$0xff]
    %v88 = vld [vmem:[#allocation2 + $0x78] sm:$0xff]
    %105 = vrot.lane.b32.xlu0 %v73, 1
    %v106 = vpop.permute.xlu0 %105
    %107 = vrot.lane.b32.xlu0 %v74, 1
    %v108 = vpop.permute.xlu0 %107
    %109 = vrot.lane.b32.xlu0 %v75, 1
    %v110 = vpop.permute.xlu0 %109
    %111 = vrot.lane.b32.xlu0 %v76, 1
    %v112 = vpop.permute.xlu0 %111
    %113 = vrot.lane.b32.xlu0 %v77, 1
    %v114 = vpop.permute.xlu0 %113
    %115 = vrot.lane.b32.xlu0 %v78, 1
    %v116 = vpop.permute.xlu0 %115
    %117 = vrot.lane.b32.xlu0 %v79, 1
    %v118 = vpop.permute.xlu0 %117
    %119 = vrot.lane.b32.xlu0 %v80, 1
    %v120 = vpop.permute.xlu0 %119
    %121 = vrot.lane.b32.xlu0 %v81, 1
    %v122 = vpop.permute.xlu0 %121
    %123 = vrot.lane.b32.xlu0 %v82, 1
    %v124 = vpop.permute.xlu0 %123
    %125 = vrot.lane.b32.xlu0 %v83, 1
    %v126 = vpop.permute.xlu0 %125
    %127 = vrot.lane.b32.xlu0 %v84, 1
    %v128 = vpop.permute.xlu0 %127
    %129 = vrot.lane.b32.xlu0 %v85, 1
    %v130 = vpop.permute.xlu0 %129
    %131 = vrot.lane.b32.xlu0 %v86, 1
    %v132 = vpop.permute.xlu0 %131
    %133 = vrot.lane.b32.xlu0 %v87, 1
    %v134 = vpop.permute.xlu0 %133
    %135 = vrot.lane.b32.xlu0 %v88, 1
    %v136 = vpop.permute.xlu0 %135
    %vm153 = vcmask 138248
    %154 = vst.msk [vmem:[%s1 + $0x1] sm:$0xff] %vm153, %v106
    %155 = vst.msk [vmem:[%s1 + $0x9] sm:$0xff] %vm153, %v108
    %156 = vst.msk [vmem:[%s1 + $0x19] sm:$0xff] %vm153, %v110
    %157 = vst.msk [vmem:[%s1 + $0x21] sm:$0xff] %vm153, %v112
    %158 = vst.msk [vmem:[%s1 + $0x31] sm:$0xff] %vm153, %v114
    %159 = vst.msk [vmem:[%s1 + $0x39] sm:$0xff] %vm153, %v116
    %160 = vst.msk [vmem:[%s1 + $0x49] sm:$0xff] %vm153, %v118
    %161 = vst.msk [vmem:[%s1 + $0x51] sm:$0xff] %vm153, %v120
    %162 = vst.msk [vmem:[%s1 + $0x61] sm:$0xff] %vm153, %v122
    %163 = vst.msk [vmem:[%s1 + $0x69] sm:$0xff] %vm153, %v124
    %164 = vst.msk [vmem:[%s1 + $0x79] sm:$0xff] %vm153, %v126
    %165 = vst.msk [vmem:[%s1 + $0x81] sm:$0xff] %vm153, %v128
    %166 = vst.msk [vmem:[%s1 + $0x91] sm:$0xff] %vm153, %v130
    %167 = vst.msk [vmem:[%s1 + $0x99] sm:$0xff] %vm153, %v132
    %168 = vst.msk [vmem:[%s1 + $0xa9] sm:$0xff] %vm153, %v134
    %169 = vst.msk [vmem:[%s1 + $0xb1] sm:$0xff] %vm153, %v136
    // Predicated region
    $region10: #{tpu_custom_call.1} parent=1 // pred_check
      _
    $region11: #{tpu_custom_call.1} parent=1 // pred_check_branch
      %171 = sbr.rel (0) target = $region13
    $region12: #{tpu_custom_call.1} parent=1 // pred_region
      _
    $region13: #{tpu_custom_call.1} parent=1 // pred_fallthru
      _
    // Predicated region
    $region14: #{tpu_custom_call.1} parent=1 // pred_check
      _
    $region15: #{tpu_custom_call.1} parent=1 // pred_check_branch
      %173 = sbr.rel (0) target = $region17
    $region16: #{tpu_custom_call.1} parent=1 // pred_region
      _
    $region17: #{tpu_custom_call.1} parent=1 // pred_fallthru
      _
    %174 = vsyncpa [#allocation3], 1

</llo_original>
